<compile_context>
chip_gen: v6e
topology: v6e:2x2x1
jax: 0.10.0
libtpu: 0.0.40
codegen_flags: <defaults>
</compile_context>

<pallas_src>
import functools
from collections import namedtuple

import jax
import jax.numpy as jnp
from jax import lax
from jax.experimental import pallas as pl
from jax.experimental.pallas import tpu as pltpu


# ---------------------------------------------------------------------------
# Generation-aware budgets
# ---------------------------------------------------------------------------
def _vmem_capacity_bytes():
    try:
        cap = getattr(pltpu.get_tpu_info(), "vmem_capacity_bytes", None)
        if cap:
            return int(cap)
    except Exception:
        pass
    return 64 << 20  # conservative default (v7x per-TensorCore)


@functools.lru_cache(maxsize=1)
def _chip_budgets():
    cap = _vmem_capacity_bytes()
    if cap >= (96 << 20):  # v5e / v6e class (128 MiB physical VMEM)
        return dict(vmem_limit=96 << 20, block_budget=16 << 20, fused_budget=40 << 20)
    # v7x class (64 MiB per TensorCore) or unknown -> conservative
    return dict(vmem_limit=44 << 20, block_budget=4 << 20, fused_budget=18 << 20)


def _sublane_multiple(itemsize):
    # f32 -> 8, bf16 -> 16, int8/fp8 -> 32
    return max(8, 32 // max(1, itemsize))


# ---------------------------------------------------------------------------
# Tiling plans
# ---------------------------------------------------------------------------
_Plan = namedtuple("_Plan", ["kind", "tile_c", "tile_r", "ts_stats", "ts_apply",
                             "vmem_limit"])


def _fused_channel_tile(n, c, s, itemsize, budget):
    """Channel tile for the fully VMEM-resident fused path, or None if it won't fit."""
    sub = _sublane_multiple(itemsize)
    per_chan = n * s * itemsize * 4            # x + y blocks, double-buffered
    if per_chan <= 0 or per_chan > budget:
        return None
    tc = budget // per_chan
    if tc >= c:
        # Whole tensor fits in one block: still split (when legal) so the grid has
        # >= 2 steps -> v7x dual-TC sharding and DMA/compute overlap.
        if c >= 2 * sub:
            return max(sub, ((c // 2) // sub) * sub)
        return c
    if tc < sub:
        return None                            # can't form a legal partial-C block
    return (tc // sub) * sub


def _row_tiles(m, s, itemsize, budget):
    """(tile_rows, tile_s) for the streaming stats pass over the (N*C, H*W) view."""
    sub = _sublane_multiple(itemsize)
    row_bytes = s * itemsize
    tr = max(1, budget // max(1, row_bytes))
    if tr >= m:
        if m >= 2 * sub:                       # keep >= 2 grid steps when legal
            return max(sub, ((m // 2) // sub) * sub), s
        return m, s
    if tr >= sub:
        return (tr // sub) * sub, s
    # even the minimum legal row tile blows the budget -> tile the lane axis too
    tr = min(m, sub)
    ts = max(128, ((budget // max(1, tr * itemsize)) // 128) * 128)
    return tr, min(ts, s)


def _cs_tiles(c, s, itemsize, budget):
    """(tile_c, tile_s) for the streaming apply pass over the (N, C, H*W) view."""
    sub = _sublane_multiple(itemsize)
    row_bytes = s * itemsize
    tc = max(1, budget // max(1, row_bytes))
    if tc >= c:
        return c, s
    if tc >= sub:
        return (tc // sub) * sub, s
    tc = min(c, sub)
    ts = max(128, ((budget // max(1, tc * itemsize)) // 128) * 128)
    return tc, min(ts, s)


def _make_plan(n, c, h, w, itemsize, force_streaming=False, max_block_bytes=None):
    b = _chip_budgets()
    s = h * w
    block_budget = max_block_bytes if max_block_bytes is not None else b["block_budget"]
    if not force_streaming:
        fused_budget = max_block_bytes if max_block_bytes is not None else b["fused_budget"]
        tc = _fused_channel_tile(n, c, s, itemsize, fused_budget)
        if tc is not None:
            return _Plan("fused", tc, 0, 0, 0, b["vmem_limit"])
    tr, ts_stats = _row_tiles(n * c, s, itemsize, block_budget)
    tc, ts_apply = _cs_tiles(c, s, itemsize, block_budget)
    return _Plan("stream", tc, tr, ts_stats, ts_apply, b["vmem_limit"])


# ---------------------------------------------------------------------------
# Fused path: whole batch for a channel block resident in VMEM.
# One pallas_call -> read x once, write y once (2 HBM passes instead of 3).
# ---------------------------------------------------------------------------
def _make_fused_kernel(count, eps):
    inv_count = 1.0 / count

    def kernel(x_ref, wb_ref, y_ref, st_ref):
        x = x_ref[...].astype(jnp.float32)                    # (N, tc, S)
        # batch reduction: plain VPU vreg adds over the leading (non-layout) axis
        sx = jnp.sum(x, axis=0)                               # (tc, S)
        sxx = jnp.sum(x * x, axis=0)
        # lane reduction on the MXU (idle otherwise) instead of the XLU
        ones_col = jnp.ones((x.shape[2], 1), jnp.float32)
        mean = jnp.dot(sx, ones_col, preferred_element_type=jnp.float32) * inv_count
        msq = jnp.dot(sxx, ones_col, preferred_element_type=jnp.float32) * inv_count
        var = jnp.maximum(msq - mean * mean, 0.0)             # F.relu(E[x^2]-E[x]^2)
        scale = wb_ref[:, 0:1] * lax.rsqrt(var + eps)         # (tc, 1)
        shift = wb_ref[:, 1:2] - mean * scale
        y_ref[...] = (x * scale[None, :, :] + shift[None, :, :]).astype(y_ref.dtype)
        st_ref[...] = jnp.concatenate([mean, var], axis=1)    # (tc, 2)

    return kernel


def _fused_bn(x3, wb, eps, tile_c, vmem_limit):
    n, c, s = x3.shape
    kernel = _make_fused_kernel(float(n * s), float(eps))
    xy_spec = pl.BlockSpec((n, tile_c, s), lambda j: (0, j, 0))
    st_spec = pl.BlockSpec((tile_c, 2), lambda j: (j, 0))
    return pl.pallas_call(
        kernel,
        out_shape=(jax.ShapeDtypeStruct((n, c, s), x3.dtype),
                   jax.ShapeDtypeStruct((c, 2), jnp.float32)),
        grid=(pl.cdiv(c, tile_c),),
        in_specs=[xy_spec, st_spec],
        out_specs=(xy_spec, st_spec),
        compiler_params=pltpu.CompilerParams(
            dimension_semantics=("parallel",),
            vmem_limit_bytes=vmem_limit,
        ),
    )(x3, wb)


# ---------------------------------------------------------------------------
# Streaming pass 1: per-row (= per (n, c)) [sum, sumsq] over the spatial axis.
# Lane reduce via MXU dot(x, ones); sum & sumsq share one (N*C, 2) output.
# Lane-tiled with masked accumulation when H*W exceeds the block budget.
# ---------------------------------------------------------------------------
def _make_row_stats_kernel(s_total, tile_s, need_mask):
    def kernel(x_ref, out_ref):
        @pl.when(pl.program_id(1) == 0)
        def _init():
            out_ref[...] = jnp.zeros_like(out_ref)

        x = x_ref[...].astype(jnp.float32)                    # (TR, TS)
        if need_mask:  # ragged last lane block: zero out padding lanes before summing
            lane = lax.broadcasted_iota(jnp.int32, x.shape, 1) + pl.program_id(1) * tile_s
            x = jnp.where(lane < s_total, x, 0.0)
        ones_col = jnp.ones((x.shape[1], 1), jnp.float32)
        s1 = jnp.dot(x, ones_col, preferred_element_type=jnp.float32)      # (TR, 1)
        s2 = jnp.dot(x * x, ones_col, preferred_element_type=jnp.float32)  # (TR, 1)
        out_ref[...] += jnp.concatenate([s1, s2], axis=1)

    return kernel


def _row_stats(x2, tile_r, tile_s, vmem_limit):
    m, s = x2.shape
    kernel = _make_row_stats_kernel(s, tile_s, (s % tile_s) != 0)
    return pl.pallas_call(
        kernel,
        out_shape=jax.ShapeDtypeStruct((m, 2), jnp.float32),
        grid=(pl.cdiv(m, tile_r), pl.cdiv(s, tile_s)),
        in_specs=[pl.BlockSpec((tile_r, tile_s), lambda i, j: (i, j))],
        out_specs=pl.BlockSpec((tile_r, 2), lambda i, j: (i, 0)),
        compiler_params=pltpu.CompilerParams(
            dimension_semantics=("parallel", "arbitrary"),
            vmem_limit_bytes=vmem_limit,
        ),
    )(x2)


# ---------------------------------------------------------------------------
# Streaming pass 2: y = x * scale[c] + shift[c] over the (N, C, H*W) view.
# scale/shift stay packed as one tiny (C, 2) array fetched per channel block.
# ---------------------------------------------------------------------------
def _apply_kernel(x_ref, ss_ref, y_ref):
    x = x_ref[...].astype(jnp.float32)                        # (1, tc, TS)
    scale = ss_ref[:, 0:1]                                    # (tc, 1)
    shift = ss_ref[:, 1:2]
    # TODO(synk): for bf16 inputs on v6e/v7x a bf16 VPU apply (fold scale/shift to
    # bf16 once per block) would halve VALU work; f32 kept here for all generations.
    y_ref[...] = (x * scale[None, :, :] + shift[None, :, :]).astype(y_ref.dtype)


def _apply_bn(x3, ss, tile_c, tile_s, vmem_limit):
    n, c, s = x3.shape
    xy_spec = pl.BlockSpec((1, tile_c, tile_s), lambda i, j, k: (i, j, k))
    return pl.pallas_call(
        _apply_kernel,
        out_shape=jax.ShapeDtypeStruct((n, c, s), x3.dtype),
        grid=(n, pl.cdiv(c, tile_c), pl.cdiv(s, tile_s)),
        in_specs=[xy_spec, pl.BlockSpec((tile_c, 2), lambda i, j, k: (j, 0))],
        out_specs=xy_spec,
        compiler_params=pltpu.CompilerParams(
            dimension_semantics=("parallel", "parallel", "parallel"),
            vmem_limit_bytes=vmem_limit,
        ),
    )(x3, ss)


# ---------------------------------------------------------------------------
# Module-level forward (StochBN path, 'batch'/'batch' strategies)
# ---------------------------------------------------------------------------
@functools.partial(jax.jit,
                   static_argnames=("plan", "eps", "stats_momentum", "training"))
def _forward_impl(x, weight, bias, state, *, plan, eps, stats_momentum, training):
    n, c, h, w = x.shape
    s = h * w
    x3 = x.reshape(n, c, s)                  # free view under jit, no extra HBM pass
    w32 = weight.astype(jnp.float32)
    b32 = bias.astype(jnp.float32)

    if plan.kind == "fused":
        wb = jnp.stack([w32, b32], axis=1)                                 # (C, 2)
        y3, st = _fused_bn(x3, wb, eps, plan.tile_c, plan.vmem_limit)
        cur_mean, cur_var = st[:, 0], st[:, 1]
    else:
        row = _row_stats(x3.reshape(n * c, s), plan.tile_r, plan.ts_stats,
                         plan.vmem_limit)                                  # (N*C, 2)
        ch = row.reshape(n, c, 2).sum(axis=0)                              # tiny glue
        count = jnp.float32(n * s)
        cur_mean = ch[:, 0] / count
        cur_var = jnp.maximum(ch[:, 1] / count - cur_mean * cur_mean, 0.0)
        scale = w32 * lax.rsqrt(cur_var + jnp.float32(eps))
        shift = b32 - cur_mean * scale
        ss = jnp.stack([scale, shift], axis=1)                             # (C, 2)
        y3 = _apply_bn(x3, ss, plan.tile_c, plan.ts_apply, plan.vmem_limit)

    y = y3.reshape(n, c, h, w)

    # --- running-buffer bookkeeping (tiny (C,) vectors; plain-JAX glue) ---
    new_state = dict(state)
    new_state["cur_mean"] = cur_mean
    new_state["cur_var"] = cur_var
    if training:
        mom = stats_momentum
        logv = jnp.log(cur_var + 1e-6)
        running_m = (1 - mom) * state["running_m"] + mom * cur_mean
        running_m2 = (1 - mom) * state["running_m2"] + mom * cur_mean ** 2
        running_logvar = (1 - mom) * state["running_logvar"] + mom * logv
        running_logvar2 = (1 - mom) * state["running_logvar2"] + mom * logv ** 2
        new_state.update(
            running_m=running_m, running_m2=running_m2,
            running_logvar=running_logvar, running_logvar2=running_logvar2,
            running_mean_mean=running_m,
            running_mean_var=running_m2 - running_m ** 2,
            running_logvar_mean=running_logvar,
            running_logvar_var=running_logvar2 - running_logvar ** 2,
            running_mean=running_m,
            running_var=jnp.exp(running_logvar),
        )
    else:
        new_state["running_mean"] = state["running_mean_mean"]
        new_state["running_var"] = jnp.exp(state["running_logvar_mean"])
    return y, new_state


def stochbn_forward(x_nchw, weight, bias, state, *, eps=1e-5, stats_momentum=0.1,
                    training=True, force_streaming=False, max_block_bytes=None):
    """Forward of _MyBatchNorm in 'StochBN' mode with mean/var strategy 'batch'.

    Returns (y, new_state).
    # TODO(synk): 'sample'/'running' mean/var strategies, 'uncorr'/'correction'
    # eval-time paths and learn_stats=True are randomized/stateful torch-side
    # branches not exercised by the default config; only the hot path is kernelized.
    # TODO(synk): for heavily ragged spatial sizes (e.g. 7x7) a lane-dense repack
    # of H*W would further improve store bandwidth.
    """
    n, c, h, w = x_nchw.shape
    plan = _make_plan(n, c, h, w, jnp.dtype(x_nchw.dtype).itemsize,
                      force_streaming=force_streaming,
                      max_block_bytes=max_block_bytes)
    return _forward_impl(x_nchw, weight, bias, state, plan=plan,
                         eps=float(eps), stats_momentum=float(stats_momentum),
                         training=bool(training))


def init_state(num_features, dtype=jnp.float32):
    z = jnp.zeros((num_features,), dtype)
    o = jnp.ones((num_features,), dtype)
    return dict(
        running_mean=z, running_var=o, cur_mean=z, cur_var=o,
        running_m=z, running_m2=z, running_logvar=z, running_logvar2=z,
        running_mean_mean=z, running_mean_var=o,
        running_logvar_mean=z, running_logvar_var=o,
    )


if __name__ == "__main__":
    key = jax.random.PRNGKey(0)
    kx, kw, kx2 = jax.random.split(key, 3)

    def ref_forward(x, weight, bias, eps=1e-5):
        mean = x.mean(axis=(0, 2, 3))
        var = jnp.maximum((x ** 2).mean(axis=(0, 2, 3)) - mean ** 2, 0.0)
        y = ((x - mean[None, :, None, None])
             / jnp.sqrt(var[None, :, None, None] + eps)
             * weight[None, :, None, None] + bias[None, :, None, None])
        return y, mean, var

    ok = True

    # Case 1: small shape -> fused VMEM-resident path.
    N, C, H, W = 2, 4, 16, 16
    x = jax.random.normal(kx, (N, C, H, W), dtype=jnp.float32)
    weight = jax.random.uniform(kw, (C,), dtype=jnp.float32)  # reset_parameters(): U[0,1)
    bias = jnp.zeros((C,), dtype=jnp.float32)
    state = init_state(C)

    y, new_state = stochbn_forward(x, weight, bias, state, eps=1e-5,
                                   stats_momentum=0.1, training=True)
    y = jax.block_until_ready(y)
    y_ref, m_ref, v_ref = ref_forward(x, weight, bias)
    ok &= bool(jnp.allclose(y, y_ref, atol=1e-4, rtol=1e-4))
    ok &= bool(jnp.allclose(new_state["cur_mean"], m_ref, atol=1e-5, rtol=1e-5))
    ok &= bool(jnp.allclose(new_state["cur_var"], v_ref, atol=1e-5, rtol=1e-5))

    # Case 2: same input, forced two-pass streaming path.
    y2, st2 = stochbn_forward(x, weight, bias, state, eps=1e-5,
                              stats_momentum=0.1, training=True,
                              force_streaming=True)
    y2 = jax.block_until_ready(y2)
    ok &= bool(jnp.allclose(y2, y_ref, atol=1e-4, rtol=1e-4))
    ok &= bool(jnp.allclose(st2["cur_mean"], m_ref, atol=1e-5, rtol=1e-5))

    # Case 3: ragged spatial (H*W = 192, not a multiple of 128) + tiny block budget,
    # exercising masked lane-tiled stats accumulation and the lane-tiled apply pass.
    N3, C3, H3, W3 = 2, 4, 16, 12
    x3 = jax.random.normal(kx2, (N3, C3, H3, W3), dtype=jnp.float32) - 1.5
    y3, st3 = stochbn_forward(x3, weight, bias, init_state(C3), eps=1e-5,
                              stats_momentum=0.1, training=True,
                              force_streaming=True, max_block_bytes=2048)
    y3 = jax.block_until_ready(y3)
    y3_ref, m3_ref, v3_ref = ref_forward(x3, weight, bias)
    ok &= bool(jnp.allclose(y3, y3_ref, atol=1e-4, rtol=1e-4))
    ok &= bool(jnp.allclose(st3["cur_mean"], m3_ref, atol=1e-5, rtol=1e-5))
    ok &= bool(jnp.allclose(st3["cur_var"], v3_ref, atol=1e-5, rtol=1e-5))

    if ok:
        print("KERNEL_OK")
    else:
        raise SystemExit("mismatch vs reference")
</pallas_src>

<mosaic_0001>
module attributes {stable_mosaic.version = 11 : i64} {
  func.func @kernel(%arg0: i32, %arg1: memref<2x4x256xf32, #tpu.memory_space<vmem>>, %arg2: memref<4x2xf32, #tpu.memory_space<vmem>>, %arg3: memref<2x4x256xf32, #tpu.memory_space<vmem>>, %arg4: memref<4x2xf32, #tpu.memory_space<vmem>>) attributes {dimension_semantics = [#tpu.dimension_semantics<parallel>], iteration_bounds = array<i64: 1>, scalar_prefetch = 0 : i64, scratch_operands = 0 : i64, tpu.core_type = #tpu.core_type<tc>, window_params = [{transform_indices = @transform_0, window_bounds = array<i64: 2, 4, 256>}, {transform_indices = @transform_1, window_bounds = array<i64: 4, 2>}, {transform_indices = @transform_2, window_bounds = array<i64: 2, 4, 256>}, {transform_indices = @transform_3, window_bounds = array<i64: 4, 2>}]} {
    %c0 = arith.constant 0 : index
    %c0_0 = arith.constant 0 : index
    %c0_1 = arith.constant 0 : index
    %0 = vector.load %arg1[%c0, %c0_0, %c0_1] : memref<2x4x256xf32, #tpu.memory_space<vmem>>, vector<2x4x256xf32>
    %cst = arith.constant dense<0.000000e+00> : vector<4x256xf32>
    %1 = vector.multi_reduction <add>, %0, %cst [0] : vector<2x4x256xf32> to vector<4x256xf32>
    %2 = arith.mulf %0, %0 : vector<2x4x256xf32>
    %cst_2 = arith.constant dense<0.000000e+00> : vector<4x256xf32>
    %3 = vector.multi_reduction <add>, %2, %cst_2 [0] : vector<2x4x256xf32> to vector<4x256xf32>
    %cst_3 = arith.constant 1.000000e+00 : f32
    %4 = vector.broadcast %cst_3 : f32 to vector<256x1xf32>
    %cst_4 = arith.constant dense<0.000000e+00> : vector<4x1xf32>
    %5 = tpu.matmul %1, %4, %cst_4 {dimension_numbers = #tpu.dot_dimension_numbers<[1], [0], [0], [1], [0, 0, 1, 1], [], []>} : vector<4x256xf32>, vector<256x1xf32>, vector<4x1xf32> -> vector<4x1xf32>
    %cst_5 = arith.constant 0.001953125 : f32
    %6 = vector.broadcast %cst_5 : f32 to vector<4x1xf32>
    %7 = arith.mulf %5, %6 : vector<4x1xf32>
    %cst_6 = arith.constant dense<0.000000e+00> : vector<4x1xf32>
    %8 = tpu.matmul %3, %4, %cst_6 {dimension_numbers = #tpu.dot_dimension_numbers<[1], [0], [0], [1], [0, 0, 1, 1], [], []>} : vector<4x256xf32>, vector<256x1xf32>, vector<4x1xf32> -> vector<4x1xf32>
    %cst_7 = arith.constant 0.001953125 : f32
    %9 = vector.broadcast %cst_7 : f32 to vector<4x1xf32>
    %10 = arith.mulf %8, %9 : vector<4x1xf32>
    %11 = arith.mulf %7, %7 : vector<4x1xf32>
    %12 = arith.subf %10, %11 : vector<4x1xf32>
    %cst_8 = arith.constant 0.000000e+00 : f32
    %13 = vector.broadcast %cst_8 : f32 to vector<4x1xf32>
    %14 = arith.maximumf %12, %13 : vector<4x1xf32>
    %c0_9 = arith.constant 0 : index
    %c0_10 = arith.constant 0 : index
    %15 = vector.load %arg2[%c0_9, %c0_10] : memref<4x2xf32, #tpu.memory_space<vmem>>, vector<4x1xf32>
    %cst_11 = arith.constant 9.99999974E-6 : f32
    %16 = vector.broadcast %cst_11 : f32 to vector<4x1xf32>
    %17 = arith.addf %14, %16 : vector<4x1xf32>
    %18 = math.rsqrt %17 : vector<4x1xf32>
    %19 = arith.mulf %15, %18 : vector<4x1xf32>
    %c0_12 = arith.constant 0 : index
    %c1 = arith.constant 1 : index
    %20 = vector.load %arg2[%c0_12, %c1] : memref<4x2xf32, #tpu.memory_space<vmem>>, vector<4x1xf32>
    %21 = arith.mulf %7, %19 : vector<4x1xf32>
    %22 = arith.subf %20, %21 : vector<4x1xf32>
    %23 = vector.shape_cast %19 : vector<4x1xf32> to vector<1x4x1xf32>
    %24 = vector.broadcast %23 : vector<1x4x1xf32> to vector<2x4x256xf32>
    %25 = arith.mulf %0, %24 : vector<2x4x256xf32>
    %26 = vector.shape_cast %22 : vector<4x1xf32> to vector<1x4x1xf32>
    %27 = vector.broadcast %26 : vector<1x4x1xf32> to vector<2x4x256xf32>
    %28 = arith.addf %25, %27 : vector<2x4x256xf32>
    %c0_13 = arith.constant 0 : index
    %c0_14 = arith.constant 0 : index
    %c0_15 = arith.constant 0 : index
    %29 = vector.load %arg3[%c0_13, %c0_14, %c0_15] : memref<2x4x256xf32, #tpu.memory_space<vmem>>, vector<2x4x256xf32>
    tpu.vector_store %arg3[%c0_13, %c0_14, %c0_15], %28 {strides = array<i32>} : memref<2x4x256xf32, #tpu.memory_space<vmem>>, vector<2x4x256xf32>,
    %30 = tpu.concatenate %7, %14 in 1 : vector<4x1xf32>, vector<4x1xf32> -> vector<4x2xf32>
    %c0_16 = arith.constant 0 : index
    %c0_17 = arith.constant 0 : index
    %31 = vector.load %arg4[%c0_16, %c0_17] : memref<4x2xf32, #tpu.memory_space<vmem>>, vector<4x2xf32>
    tpu.vector_store %arg4[%c0_16, %c0_17], %30 {strides = array<i32>} : memref<4x2xf32, #tpu.memory_space<vmem>>, vector<4x2xf32>,
    return
  }
  func.func @transform_0(%arg0: i32) -> (i32, i32, i32) {
    %c0_i32 = arith.constant 0 : i32
    %c0_i32_0 = arith.constant 0 : i32
    %c0_i32_1 = arith.constant 0 : i32
    return %c0_i32, %arg0, %c0_i32_0 : i32, i32, i32
  }
  func.func @transform_1(%arg0: i32) -> (i32, i32) {
    %c0_i32 = arith.constant 0 : i32
    %c0_i32_0 = arith.constant 0 : i32
    return %arg0, %c0_i32 : i32, i32
  }
  func.func @transform_2(%arg0: i32) -> (i32, i32, i32) {
    %c0_i32 = arith.constant 0 : i32
    %c0_i32_0 = arith.constant 0 : i32
    %c0_i32_1 = arith.constant 0 : i32
    return %c0_i32, %arg0, %c0_i32_0 : i32, i32, i32
  }
  func.func @transform_3(%arg0: i32) -> (i32, i32) {
    %c0_i32 = arith.constant 0 : i32
    %c0_i32_0 = arith.constant 0 : i32
    return %arg0, %c0_i32 : i32, i32
  }
}

</mosaic_0001>

<llo_original>
// kernel: _forward_impl.1
$region0: #{_forward_impl.1}
  #allocation0 [shape = 'u32[]', space=smem, size = 0x4, offset = 0x4, fixed_abs, tag = 'smem constant byte address 0x4 - core index']
  #allocation1 [shape = 'u32[144,128]{1,0:T(1,128)}', space=vmem, size = 0x12000, scoped, tag = 'internal scratch']
  %s0 = inlined_call_operand.vmem [shape: f32[2,4,256], index: 0, kind: input, shape index: {}]
  %s1 = inlined_call_operand.vmem [shape: f32[4,2], index: 1, kind: input, shape index: {}]
  %s2 = inlined_call_operand.vmem [shape: f32[2,4,256], index: 2, kind: output, shape index: {0}]
  %s3 = inlined_call_operand.vmem [shape: f32[4,2], index: 3, kind: output, shape index: {1}]
  %4 = xla_tuple %s2, %s3
  %s5 = sld [smem:[#allocation0]]
  $region26: #{_forward_impl.1} parent=0
    _
  %s7 = ssub.s32 1, %s5
  %s8 = scalar_select 0, %s7, %s5
  // Predicated region
  $region2: #{_forward_impl.1} parent=0 // pred_check
    _
  $region3: #{_forward_impl.1} parent=0 // pred_check_branch
    %10 = sbr.rel (0) target = $region5
  $region4: #{_forward_impl.1} parent=0 // pred_region
    _
  $region5: #{_forward_impl.1} parent=0 // pred_fallthru
    _
  // Predicated region
  $region6: #{_forward_impl.1} parent=0 // pred_check
    _
  $region7: #{_forward_impl.1} parent=0 // pred_check_branch
    %12 = sbr.rel (0) target = $region9
  $region8: #{_forward_impl.1} parent=0 // pred_region
    _
  $region9: #{_forward_impl.1} parent=0 // pred_fallthru
    _
  %v13 = vld [vmem:[%s0] sm:$0xff]
  %v14 = vld [vmem:[%s0 + $0x8] sm:$0xff]
  %v17 = vcombine.high %v13, %v13
  %v18 = vcombine.high %v14, %v14
  %vm21 = vcmask 1043456
  %v22 = vsel %vm21, %v13, 0.0
  %v23 = vsel %vm21, %v14, 0.0
  %v24 = vadd.f32 %v22, %v23
  %v25 = vsel %vm21, %v17, 0.0
  %v26 = vsel %vm21, %v18, 0.0
  %v27 = vadd.f32 %v25, %v26
  %v28 = vmul.f32 %v13, %v13
  %v29 = vmul.f32 %v14, %v14
  %v32 = vcombine.high %v28, %v28
  %v33 = vcombine.high %v29, %v29
  %v36 = vsel %vm21, %v28, 0.0
  %v37 = vsel %vm21, %v29, 0.0
  %v38 = vadd.f32 %v36, %v37
  %v39 = vsel %vm21, %v32, 0.0
  %v40 = vsel %vm21, %v33, 0.0
  %v41 = vadd.f32 %v39, %v40
  %42 = vmatprep.subr.mxu0 0.0
  %43 = vmatpush1.msra.mxu0 1.0
  %44 = vmatprep.subr.mxu0 0.0
  %45 = vmatpush1.msra.mxu0 1.0
  %46 = vmatprep.subr.mxu0 0.0
  %47 = vmatpush1.msra.mxu0 1.0
  %48 = vmatprep.subr.mxu0 0.0
  %49 = vmatpush1.msra.mxu0 1.0
  %50 = vmatprep.subr.mxu0 0.0
  %51 = vmatpush1.msra.mxu0 1.0
  %52 = vmatprep.subr.mxu0 0.0
  %53 = vmatpush1.msra.mxu0 1.0
  %54 = vmatprep.subr.mxu0 0.0
  %55 = vmatpush1.msra.mxu0 1.0
  %56 = vmatprep.subr.mxu0 0.0
  %57 = vmatpush1.msra.mxu0 1.0
  %58 = vmatprep.subr.mxu0 0.0
  %59 = vmatpush1.msra.mxu0 1.0
  %60 = vmatprep.subr.mxu0 0.0
  %61 = vmatpush1.msra.mxu0 1.0
  %62 = vmatprep.subr.mxu0 0.0
  %63 = vmatpush1.msra.mxu0 1.0
  %64 = vmatprep.subr.mxu0 0.0
  %65 = vmatpush1.msra.mxu0 1.0
  %66 = vmatprep.subr.mxu0 0.0
  %67 = vmatpush1.msra.mxu0 1.0
  %68 = vmatprep.subr.mxu0 0.0
  %69 = vmatpush1.msra.mxu0 1.0
  %70 = vmatprep.subr.mxu0 0.0
  %71 = vmatpush1.msra.mxu0 1.0
  %72 = vmatprep.subr.mxu0 0.0
  %73 = vmatpush1.msra.mxu0 1.0
  %74 = vmatprep.subr.mxu0 0.0
  %75 = vmatpush2.msra.mxu0 1.0
  %76 = vmatprep.subr.mxu0 0.0
  %77 = vmatpush2.msra.mxu0 1.0
  %78 = vmatprep.subr.mxu0 0.0
  %79 = vmatpush2.msra.mxu0 1.0
  %80 = vmatprep.subr.mxu0 0.0
  %81 = vmatpush2.msra.mxu0 1.0
  %82 = vmatprep.subr.mxu0 0.0
  %83 = vmatpush2.msra.mxu0 1.0
  %84 = vmatprep.subr.mxu0 0.0
  %85 = vmatpush2.msra.mxu0 1.0
  %86 = vmatprep.subr.mxu0 0.0
  %87 = vmatpush2.msra.mxu0 1.0
  %88 = vmatprep.subr.mxu0 0.0
  %89 = vmatpush2.msra.mxu0 1.0
  %90 = vmatprep.subr.mxu0 0.0
  %91 = vmatpush2.msra.mxu0 1.0
  %92 = vmatprep.subr.mxu0 0.0
  %93 = vmatpush2.msra.mxu0 1.0
  %94 = vmatprep.subr.mxu0 0.0
  %95 = vmatpush2.msra.mxu0 1.0
  %96 = vmatprep.subr.mxu0 0.0
  %97 = vmatpush2.msra.mxu0 1.0
  %98 = vmatprep.subr.mxu0 0.0
  %99 = vmatpush2.msra.mxu0 1.0
  %100 = vmatprep.subr.mxu0 0.0
  %101 = vmatpush2.msra.mxu0 1.0
  %102 = vmatprep.subr.mxu0 0.0
  %103 = vmatpush2.msra.mxu0 1.0
  %104 = vmatprep.subr.mxu0 0.0
  %105 = vmatpush2.msra.mxu0 1.0
  %106 = vmatprep.mubr.f32.mxu0 %v27
  %107 = vmatmul.mubr.f32.gmra.mxu0 %v24
  %v108 = vpop.f32.mrf.mxu0
  %v109 = vadd.f32 0.0, %v108
  %v110 = vpop.f32.mrf.mxu0
  %111 = vdwg.mxu0
  %v112 = vmul.f32 %v109, 0.001953125
  %113 = vmatprep.subr.mxu0 0.0
  %114 = vmatpush1.msra.mxu0 1.0
  %115 = vmatprep.subr.mxu0 0.0
  %116 = vmatpush1.msra.mxu0 1.0
  %117 = vmatprep.subr.mxu0 0.0
  %118 = vmatpush1.msra.mxu0 1.0
  %119 = vmatprep.subr.mxu0 0.0
  %120 = vmatpush1.msra.mxu0 1.0
  %121 = vmatprep.subr.mxu0 0.0
  %122 = vmatpush1.msra.mxu0 1.0
  %123 = vmatprep.subr.mxu0 0.0
  %124 = vmatpush1.msra.mxu0 1.0
  %125 = vmatprep.subr.mxu0 0.0
  %126 = vmatpush1.msra.mxu0 1.0
  %127 = vmatprep.subr.mxu0 0.0
  %128 = vmatpush1.msra.mxu0 1.0
  %129 = vmatprep.subr.mxu0 0.0
  %130 = vmatpush1.msra.mxu0 1.0
  %131 = vmatprep.subr.mxu0 0.0
  %132 = vmatpush1.msra.mxu0 1.0
  %133 = vmatprep.subr.mxu0 0.0
  %134 = vmatpush1.msra.mxu0 1.0
  %135 = vmatprep.subr.mxu0 0.0
  %136 = vmatpush1.msra.mxu0 1.0
  %137 = vmatprep.subr.mxu0 0.0
  %138 = vmatpush1.msra.mxu0 1.0
  %139 = vmatprep.subr.mxu0 0.0
  %140 = vmatpush1.msra.mxu0 1.0
  %141 = vmatprep.subr.mxu0 0.0
  %142 = vmatpush1.msra.mxu0 1.0
  %143 = vmatprep.subr.mxu0 0.0
  %144 = vmatpush1.msra.mxu0 1.0
  %145 = vmatprep.subr.mxu0 0.0
  %146 = vmatpush2.msra.mxu0 1.0
  %147 = vmatprep.subr.mxu0 0.0
  %148 = vmatpush2.msra.mxu0 1.0
  %149 = vmatprep.subr.mxu0 0.0
  %150 = vmatpush2.msra.mxu0 1.0
  %151 = vmatprep.subr.mxu0 0.0
  %152 = vmatpush2.msra.mxu0 1.0
  %153 = vmatprep.subr.mxu0 0.0
  %154 = vmatpush2.msra.mxu0 1.0
  %155 = vmatprep.subr.mxu0 0.0
  %156 = vmatpush2.msra.mxu0 1.0
  %157 = vmatprep.subr.mxu0 0.0
  %158 = vmatpush2.msra.mxu0 1.0
  %159 = vmatprep.subr.mxu0 0.0
  %160 = vmatpush2.msra.mxu0 1.0
  %161 = vmatprep.subr.mxu0 0.0
  %162 = vmatpush2.msra.mxu0 1.0
  %163 = vmatprep.subr.mxu0 0.0
  %164 = vmatpush2.msra.mxu0 1.0
  %165 = vmatprep.subr.mxu0 0.0
  %166 = vmatpush2.msra.mxu0 1.0
  %167 = vmatprep.subr.mxu0 0.0
  %168 = vmatpush2.msra.mxu0 1.0
  %169 = vmatprep.subr.mxu0 0.0
  %170 = vmatpush2.msra.mxu0 1.0
  %171 = vmatprep.subr.mxu0 0.0
  %172 = vmatpush2.msra.mxu0 1.0
  %173 = vmatprep.subr.mxu0 0.0
  %174 = vmatpush2.msra.mxu0 1.0
  %175 = vmatprep.subr.mxu0 0.0
  %176 = vmatpush2.msra.mxu0 1.0
  %177 = vmatprep.mubr.f32.mxu0 %v41
  %178 = vmatmul.mubr.f32.gmra.mxu0 %v38
  %v179 = vpop.f32.mrf.mxu0
  %v180 = vadd.f32 0.0, %v179
  %v181 = vpop.f32.mrf.mxu0
  %182 = vdwg.mxu0
  %v183 = vmul.f32 %v180, 0.001953125
  %v184 = vmul.f32 %v112, %v112
  %v185 = vsub.f32 %v183, %v184
  %v186 = vmax.f32 %v185, 0.0
  %v187 = vld [vmem:[%s1] sm:$0xf]
  %v188 = vadd.f32 %v186, 1e-05
  %v189 = vrsqrt.pop %v188
  %v190 = vmul.f32 %v187, %v189
  %v191 = vmul.f32 %v112, %v190
  %193 = vrot.lane.b32.xlu0 %v191, 1
  %v194 = vpop.permute.xlu0 %193
  %v196 = vsub.f32 %v187, %v194
  %198 = vset.pattern.permute.xlu0 0
  %199 = vperm.xlu0 %198, %v190
  %v200 = vpop.permute.xlu0 %199
  %v202 = vunpack.c.l.s4 839922192
  %v203 = vunpack.c.0.s8 %v202
  %v204 = vlaneseq
  %v205 = vshrl.u32 %v204, 7
  %v206 = vsub.s32 %v203, %v205
  %v207 = vrot.slane %v200, %v206
  %v209 = vmul.f32 %v13, %v207
  %v210 = vmul.f32 %v14, %v207
  %212 = vset.pattern.permute.xlu0 1
  %213 = vperm.xlu0 %212, %v196
  %v214 = vpop.permute.xlu0 %213
  %v216 = vunpack.c.l.s4 839922192
  %v217 = vunpack.c.0.s8 %v216
  %v218 = vlaneseq
  %v219 = vshrl.u32 %v218, 7
  %v220 = vsub.s32 %v217, %v219
  %v221 = vrot.slane %v214, %v220
  %v223 = vadd.f32 %v209, %v221
  %v224 = vadd.f32 %v210, %v221
  %225 = vst [vmem:[%s2] sm:$0xff] %v223
  %226 = vst [vmem:[%s2 + $0x8] sm:$0xff] %v224
  %228 = vrot.lane.b32.xlu0 %v186, 1
  %v229 = vpop.permute.xlu0 %228
  %vm231 = vcmask 7168
  %v232 = vsel %vm231, %v112, %v229
  %vm233 = vcmask 11264
  %234 = vst.msk [vmem:[%s3] sm:$0xf] %vm233, %v232
  // Predicated region
  $region10: #{_forward_impl.1} parent=0 // pred_check
    _
  $region11: #{_forward_impl.1} parent=0 // pred_check_branch
    %236 = sbr.rel (0) target = $region13
  $region12: #{_forward_impl.1} parent=0 // pred_region
    _
  $region13: #{_forward_impl.1} parent=0 // pred_fallthru
    _
  // Predicated region
  $region14: #{_forward_impl.1} parent=0 // pred_check
    _
  $region15: #{_forward_impl.1} parent=0 // pred_check_branch
    %238 = sbr.rel (0) target = $region17
  $region16: #{_forward_impl.1} parent=0 // pred_region
    _
  $region17: #{_forward_impl.1} parent=0 // pred_fallthru
    _
  // Predicated region
  $region18: #{_forward_impl.1} parent=0 // pred_check
    _
  $region19: #{_forward_impl.1} parent=0 // pred_check_branch
    %240 = sbr.rel (0) target = $region21
  $region20: #{_forward_impl.1} parent=0 // pred_region
    _
  $region21: #{_forward_impl.1} parent=0 // pred_fallthru
    _
  // Predicated region
  $region22: #{_forward_impl.1} parent=0 // pred_check
    _
  $region23: #{_forward_impl.1} parent=0 // pred_check_branch
    %242 = sbr.rel (0) target = $region25
  $region24: #{_forward_impl.1} parent=0 // pred_region
    _
  $region25: #{_forward_impl.1} parent=0 // pred_fallthru
    _

</llo_original>
